<compile_context>
chip_gen: v5e
topology: v5e:2x2
jax: 0.10.0
libtpu: 0.0.40
codegen_flags: <defaults>
</compile_context>

<pallas_src>
import functools
import math

import jax
import jax.numpy as jnp
from jax.experimental import pallas as pl
from jax.experimental.pallas import tpu as pltpu


# -----------------------------------------------------------------------------
# Pallas kernels: O = act(W @ X + b)   (single K block, no accumulator needed)
# -----------------------------------------------------------------------------
def _ct_kernel_linear(w_ref, x_ref, b_ref, o_ref):
    # (M, Cin) bf16 @ (Cin, tn) bf16 -> (M, tn) f32, + per-row (per-channel/tap) bias
    y = jnp.dot(w_ref[...], x_ref[...].astype(jnp.bfloat16),
                preferred_element_type=jnp.float32)
    y = y + b_ref[...]
    o_ref[...] = y.astype(o_ref.dtype)


def _ct_kernel_prelu(w_ref, x_ref, b_ref, a_ref, o_ref):
    y = jnp.dot(w_ref[...], x_ref[...].astype(jnp.bfloat16),
                preferred_element_type=jnp.float32)
    y = y + b_ref[...]
    y = jnp.where(y >= 0.0, y, a_ref[...] * y)      # per-channel PReLU
    o_ref[...] = y.astype(o_ref.dtype)


def _fused_convT_matmul(x3, w_mat, b_col, a_col, *, lane_tile=2048):
    """x3: (N, Cin, L) f32, w_mat: (M, Cin) bf16, b_col / a_col: (M, 1) f32.
    Returns (N, M, L) f32 = act(w_mat @ x3[n] + b) for every batch n."""
    N, Cin, L = x3.shape
    M = w_mat.shape[0]
    # Lane tile: full L if small (block == full dim is always legal), otherwise a
    # multiple of 128; a ragged last tile is masked by Pallas (pl.cdiv grid).
    tn = L if L <= lane_tile else lane_tile
    grid = (N, pl.cdiv(L, tn))

    in_specs = [
        pl.BlockSpec((M, Cin), lambda b, j: (0, 0)),            # resident weights
        pl.BlockSpec((None, Cin, tn), lambda b, j: (b, 0, j)),  # activation tile
        pl.BlockSpec((M, 1), lambda b, j: (0, 0)),              # bias column
    ]
    operands = [w_mat, x3, b_col]
    kernel = _ct_kernel_linear
    if a_col is not None:                                       # PReLU variant only
        in_specs.append(pl.BlockSpec((M, 1), lambda b, j: (0, 0)))
        operands.append(a_col)
        kernel = _ct_kernel_prelu

    return pl.pallas_call(
        kernel,
        out_shape=jax.ShapeDtypeStruct((N, M, L), jnp.float32),
        grid_spec=pltpu.PrefetchScalarGridSpec(
            num_scalar_prefetch=0,
            grid=grid,
            in_specs=in_specs,
            out_specs=pl.BlockSpec((None, M, tn), lambda b, j: (b, 0, j)),
        ),
        compiler_params=pltpu.CompilerParams(
            dimension_semantics=("parallel", "parallel"),
            vmem_limit_bytes=32 * 1024 * 1024),                 # safe on v5e/v6e/v7x
    )(*operands)


# -----------------------------------------------------------------------------
# ConvTransposeBlock forward
# -----------------------------------------------------------------------------
def apply_weight_norm(v, g):
    """torch weight_norm (default dim=0) on ConvTranspose3d.weight (Cin,Cout,k,k,k)."""
    norm = jnp.sqrt(jnp.sum(v * v, axis=(1, 2, 3, 4), keepdims=True))
    return g * v / norm


def conv_transpose_block(params, x, *, ks, stride, use_activ=True, lane_tile=2048):
    """x: (N, Cin, D, H, W) -> (N, Cout, stride*D+1, stride*H+1, stride*W+1)."""
    assert ks == stride and stride >= 2, "implemented for ks == stride >= 2"
    # TODO(synk): ks != stride (overlapping taps) would need a tap-accumulation K axis.
    weight = params["weight"]
    if "weight_g" in params:
        weight = apply_weight_norm(weight, params["weight_g"])
    N, Cin, D, H, W = x.shape
    Cout = weight.shape[1]
    k3 = ks ** 3
    M = Cout * k3
    L = D * H * W

    # Rows ordered (cout, td, th, tw) so the output reshape below is a pure view.
    w_mat = weight.transpose(1, 2, 3, 4, 0).reshape(M, Cin).astype(jnp.bfloat16)
    bias = params.get("bias")
    b_vec = bias if bias is not None else jnp.zeros((Cout,), jnp.float32)
    b_col = jnp.repeat(b_vec, k3).reshape(M, 1).astype(jnp.float32)
    a_col = None
    alpha = None
    if use_activ:
        alpha = params["alpha"]
        a_col = jnp.repeat(alpha, k3).reshape(M, 1).astype(jnp.float32)

    y = _fused_convT_matmul(x.reshape(N, Cin, L), w_mat, b_col, a_col,
                            lane_tile=lane_tile)

    # (N, Cout*ks^3, L) -> interleave taps into the upsampled spatial grid.
    y = y.reshape(N, Cout, ks, ks, ks, D, H, W)
    y = y.transpose(0, 1, 5, 2, 6, 3, 7, 4)            # (N,Cout,D,kd,H,kh,W,kw)
    y = y.reshape(N, Cout, ks * D, ks * H, ks * W)

    # output_padding=1: trailing plane of each spatial dim receives no taps,
    # so its value is act(bias). Assemble by concatenation (single write).
    fill = b_vec
    if use_activ:
        fill = jnp.where(fill >= 0.0, fill, alpha * fill)
    f = fill.reshape(1, Cout, 1, 1, 1).astype(y.dtype)
    sD, sH, sW = ks * D, ks * H, ks * W
    y = jnp.concatenate([y, jnp.broadcast_to(f, (N, Cout, 1, sH, sW))], axis=2)
    y = jnp.concatenate([y, jnp.broadcast_to(f, (N, Cout, sD + 1, 1, sW))], axis=3)
    y = jnp.concatenate([y, jnp.broadcast_to(f, (N, Cout, sD + 1, sH + 1, 1))], axis=4)
    return y


# -----------------------------------------------------------------------------
# Parameter init (mirrors torch defaults)
# -----------------------------------------------------------------------------
def init_params(key, in_c, out_c, ks, *, bias=True, use_activ=True,
                use_weight_norm=False):
    kw, kb = jax.random.split(key)
    fan_in = out_c * ks ** 3                       # torch fan-in for ConvTransposeNd
    bound = 1.0 / math.sqrt(fan_in)
    p = {"weight": jax.random.uniform(kw, (in_c, out_c, ks, ks, ks),
                                      jnp.float32, -bound, bound)}
    if bias:
        p["bias"] = jax.random.uniform(kb, (out_c,), jnp.float32, -bound, bound)
    if use_activ:
        p["alpha"] = 0.25 * jnp.ones((out_c,), jnp.float32)   # torch PReLU default
    if use_weight_norm:
        v = p["weight"]                            # g init = ||v|| so w == v at init
        p["weight_g"] = jnp.sqrt(jnp.sum(v * v, axis=(1, 2, 3, 4), keepdims=True))
    return p


if __name__ == "__main__":
    key = jax.random.PRNGKey(0)
    kx, kp = jax.random.split(key)
    N, in_c, out_c, S, ks, stride = 2, 32, 16, 8, 2, 2
    use_activ = True

    x = jax.random.normal(kx, (N, in_c, S, S, S), jnp.float32)
    params = init_params(kp, in_c, out_c, ks, bias=True, use_activ=use_activ)

    fwd = jax.jit(functools.partial(conv_transpose_block, ks=ks, stride=stride,
                                    use_activ=use_activ))
    out = jax.block_until_ready(fwd(params, x))

    so = stride * S + 1
    assert out.shape == (N, out_c, so, so, so), out.shape
    assert bool(jnp.all(jnp.isfinite(out)))

    # Pure-JAX fp32 reference; tolerance accounts for bf16 MXU inputs.
    w, b, a = params["weight"], params["bias"], params["alpha"]
    core = jnp.einsum("ncdhw,coxyz->nodxhywz", x, w).reshape(
        N, out_c, stride * S, stride * S, stride * S)
    ref = jnp.broadcast_to(b.reshape(1, out_c, 1, 1, 1), out.shape)
    ref = ref.at[:, :, :stride * S, :stride * S, :stride * S].add(core)
    ref = jnp.where(ref >= 0.0, ref, a.reshape(1, out_c, 1, 1, 1) * ref)
    err = float(jnp.max(jnp.abs(out - ref)))
    scale = float(jnp.max(jnp.abs(ref))) + 1e-6
    assert err <= 3e-2 * scale, (err, scale)

    print("KERNEL_OK")
</pallas_src>

<mosaic_0001>
module attributes {stable_mosaic.version = 11 : i64} {
  func.func @_ct_kernel_prelu(%arg0: i32, %arg1: i32, %arg2: memref<128x32xbf16, #tpu.memory_space<vmem>>, %arg3: memref<1x32x512xf32, #tpu.memory_space<vmem>>, %arg4: memref<128x1xf32, #tpu.memory_space<vmem>>, %arg5: memref<128x1xf32, #tpu.memory_space<vmem>>, %arg6: memref<1x128x512xf32, #tpu.memory_space<vmem>>) attributes {dimension_semantics = [#tpu.dimension_semantics<parallel>, #tpu.dimension_semantics<parallel>], iteration_bounds = array<i64: 2, 1>, scalar_prefetch = 0 : i64, scratch_operands = 0 : i64, tpu.core_type = #tpu.core_type<tc>, window_params = [{pipeline_mode = #tpu.pipeline_mode<synchronous>, transform_indices = @transform_0, window_bounds = array<i64: 128, 32>}, {transform_indices = @transform_1, window_bounds = array<i64: 1, 32, 512>}, {pipeline_mode = #tpu.pipeline_mode<synchronous>, transform_indices = @transform_2, window_bounds = array<i64: 128, 1>}, {pipeline_mode = #tpu.pipeline_mode<synchronous>, transform_indices = @transform_3, window_bounds = array<i64: 128, 1>}, {transform_indices = @transform_4, window_bounds = array<i64: 1, 128, 512>}]} {
    %c0 = arith.constant 0 : index
    %c0_0 = arith.constant 0 : index
    %0 = vector.load %arg2[%c0, %c0_0] : memref<128x32xbf16, #tpu.memory_space<vmem>>, vector<128x32xbf16>
    %c0_1 = arith.constant 0 : index
    %c0_2 = arith.constant 0 : index
    %c0_3 = arith.constant 0 : index
    %1 = vector.load %arg3[%c0_1, %c0_2, %c0_3] : memref<1x32x512xf32, #tpu.memory_space<vmem>>, vector<1x32x512xf32>
    %2 = vector.shape_cast %1 : vector<1x32x512xf32> to vector<32x512xf32>
    %3 = arith.truncf %2 : vector<32x512xf32> to vector<32x512xbf16>
    %cst = arith.constant dense<0.000000e+00> : vector<128x512xf32>
    %4 = tpu.matmul %0, %3, %cst {dimension_numbers = #tpu.dot_dimension_numbers<[1], [0], [0], [1], [0, 0, 1, 1], [], []>} : vector<128x32xbf16>, vector<32x512xbf16>, vector<128x512xf32> -> vector<128x512xf32>
    %c0_4 = arith.constant 0 : index
    %c0_5 = arith.constant 0 : index
    %5 = vector.load %arg4[%c0_4, %c0_5] : memref<128x1xf32, #tpu.memory_space<vmem>>, vector<128x1xf32>
    %6 = vector.broadcast %5 : vector<128x1xf32> to vector<128x512xf32>
    %7 = arith.addf %4, %6 : vector<128x512xf32>
    %cst_6 = arith.constant 0.000000e+00 : f32
    %8 = vector.broadcast %cst_6 : f32 to vector<128x512xf32>
    %9 = arith.cmpf oge, %7, %8 : vector<128x512xf32>
    %c0_7 = arith.constant 0 : index
    %c0_8 = arith.constant 0 : index
    %10 = vector.load %arg5[%c0_7, %c0_8] : memref<128x1xf32, #tpu.memory_space<vmem>>, vector<128x1xf32>
    %11 = vector.broadcast %10 : vector<128x1xf32> to vector<128x512xf32>
    %12 = arith.mulf %11, %7 : vector<128x512xf32>
    %13 = arith.select %9, %7, %12 : vector<128x512xi1>, vector<128x512xf32>
    %c0_9 = arith.constant 0 : index
    %c0_10 = arith.constant 0 : index
    %c0_11 = arith.constant 0 : index
    %14 = vector.load %arg6[%c0_9, %c0_10, %c0_11] : memref<1x128x512xf32, #tpu.memory_space<vmem>>, vector<1x128x512xf32>
    %15 = vector.shape_cast %14 : vector<1x128x512xf32> to vector<128x512xf32>
    %16 = vector.shape_cast %13 : vector<128x512xf32> to vector<1x128x512xf32>
    tpu.vector_store %arg6[%c0_9, %c0_10, %c0_11], %16 {strides = array<i32>} : memref<1x128x512xf32, #tpu.memory_space<vmem>>, vector<1x128x512xf32>,
    return
  }
  func.func @transform_0(%arg0: i32, %arg1: i32) -> (i32, i32) {
    %c0_i32 = arith.constant 0 : i32
    %c0_i32_0 = arith.constant 0 : i32
    %c0_i32_1 = arith.constant 0 : i32
    return %c0_i32, %c0_i32_0 : i32, i32
  }
  func.func @transform_1(%arg0: i32, %arg1: i32) -> (i32, i32, i32) {
    %c0_i32 = arith.constant 0 : i32
    %c0_i32_0 = arith.constant 0 : i32
    return %arg0, %c0_i32, %arg1 : i32, i32, i32
  }
  func.func @transform_2(%arg0: i32, %arg1: i32) -> (i32, i32) {
    %c0_i32 = arith.constant 0 : i32
    %c0_i32_0 = arith.constant 0 : i32
    %c0_i32_1 = arith.constant 0 : i32
    return %c0_i32, %c0_i32_0 : i32, i32
  }
  func.func @transform_3(%arg0: i32, %arg1: i32) -> (i32, i32) {
    %c0_i32 = arith.constant 0 : i32
    %c0_i32_0 = arith.constant 0 : i32
    %c0_i32_1 = arith.constant 0 : i32
    return %c0_i32, %c0_i32_0 : i32, i32
  }
  func.func @transform_4(%arg0: i32, %arg1: i32) -> (i32, i32, i32) {
    %c0_i32 = arith.constant 0 : i32
    %c0_i32_0 = arith.constant 0 : i32
    return %arg0, %c0_i32, %arg1 : i32, i32, i32
  }
}

</mosaic_0001>

<llo_original>
// kernel: conv_transpose_block.1
$region0: #{conv_transpose_block.1}
  #allocation0 [shape = 'u32[]', space=smem, size = 0x4, offset = 0x4, fixed_abs, tag = 'smem constant byte address 0x4 - core index']
  #allocation1 [shape = 'u32[72,128]{1,0:T(1,128)}', space=vmem, size = 0x9000, scoped, tag = 'internal scratch']
  %s0 = inlined_call_operand.vmem [shape: bf16[128,32], index: 0, kind: input, shape index: {}]
  %s1 = inlined_call_operand.vmem [shape: f32[2,32,512], index: 1, kind: input, shape index: {}]
  %s2 = inlined_call_operand.vmem [shape: f32[128,1], index: 2, kind: input, shape index: {}]
  %s3 = inlined_call_operand.vmem [shape: f32[128,1], index: 3, kind: input, shape index: {}]
  %s4 = inlined_call_operand.vmem [shape: f32[2,128,512], index: 4, kind: output, shape index: {}]
  %s5 = sld [smem:[#allocation0]]
  $region49: #{conv_transpose_block.1} parent=0
    _
  %s7 = ssub.s32 1, %s5
  %s8 = scalar_select 0, %s7, %s5
  loop: start=0, step=1, limit=4
  $region2: #{conv_transpose_block.1} parent=0 // loop_pre_header
    _
  $region3: #{conv_transpose_block.1} parent=0 // loop_header
    %s10 = sphi 0, %s14
    %p11 = scmp.ge.s32.totalorder %s10, 4
    %s17 = sphi 0, %s29
    %s18 = sphi 0, %s25
    %s19 = sphi 0, %s17
    %s20 = sphi 0, %s18
    %s21 = sphi 0, %s19
    %s22 = sphi 0, %s20
    %s30 = sphi 0, %s30
    %s32 = sphi 0, %s30
    %s33 = sphi 0, %s32
    %s47 = sphi 0, %s33
    %s55 = sphi 0, %s57
    %s58 = sphi 0, %s55
    %s59 = sphi 0, %s58
    %s75 = sphi 0, %s59
    %s79 = sphi 0, %s79
    %s81 = sphi 0, %s79
    %s82 = sphi 0, %s81
    %s96 = sphi 0, %s82
    %s100 = sphi 0, %s100
    %s102 = sphi 0, %s100
    %s103 = sphi 0, %s102
    %s117 = sphi 0, %s103
    %s125 = sphi 0, %s127
    %s128 = sphi 0, %s125
    %s129 = sphi 0, %s128
    %s145 = sphi 0, %s129
  $region4: #{conv_transpose_block.1} parent=0 // loop_header_branch
    %13 = sbr.rel (%p11) target = $region8
  $region5: #{conv_transpose_block.1} parent=0 // loop_body
    %s15 = ssub.s32 %s10, 1
    %s16 = ssub.s32 %s10, 2
    %s23 = sadd.s32 1, %s18
    %p24 = scmp.ge.s32.totalorder %s23, 1
    %s25 = scalar_select %p24, 0, %s23
    %s26 = sadd.s32 1, %s17
    %s27 = scalar_select %p24, %s26, %s17
    %p28 = scmp.ge.s32.totalorder %s27, 2
    %s29 = scalar_select %p28, 0, %s27
    %s31 = sadd.s32 %s30, 1
    %p34 = scmp.eq.s32.totalorder %s10, 1
    %p35 = scmp.ne.s32.totalorder %s30, %s32
    %p36 = scmp.eq.s32.totalorder %s10, 0
    %p37 = por %p35, %p36
    %p38 = scmp.ne.s32.totalorder %s30, %s32
    %p39 = scmp.eq.s32.totalorder %s15, 1
    %p40 = por %p38, %p39
    %p41 = scmp.ne.s32.totalorder %s32, %s33
    %p42 = scmp.eq.s32.totalorder %s15, 0
    %p43 = por %p41, %p42
    %p44 = scmp.ne.s32.totalorder %s32, %s33
    %p45 = scmp.eq.s32.totalorder %s16, 1
    %p46 = por %p44, %p45
    %p48 = scmp.ne.s32.totalorder %s33, %s47
    %p49 = scmp.eq.s32.totalorder %s16, 0
    %p50 = por %p48, %p49
    %s51 = ssub.s32 %s17, %s29
    %s52 = ssub.s32 %s18, %s25
    %s53 = sor.u32 %s51, %s52
    %p54 = scmp.eq.s32.totalorder %s53, 0
    %s56 = sadd.s32 %s55, 1
    %s57 = scalar_select %p54, %s55, %s56
    %p60 = pneg %p54
    %p61 = scmp.eq.s32.totalorder %s10, 1
    %p62 = por %p60, %p61
    %p63 = scmp.ne.s32.totalorder %s55, %s58
    %p64 = scmp.eq.s32.totalorder %s10, 0
    %p65 = por %p63, %p64
    %p66 = scmp.ne.s32.totalorder %s55, %s58
    %p67 = scmp.eq.s32.totalorder %s15, 1
    %p68 = por %p66, %p67
    %p69 = scmp.ne.s32.totalorder %s58, %s59
    %p70 = scmp.eq.s32.totalorder %s15, 0
    %p71 = por %p69, %p70
    %p72 = scmp.ne.s32.totalorder %s58, %s59
    %p73 = scmp.eq.s32.totalorder %s16, 1
    %p74 = por %p72, %p73
    %p76 = scmp.ne.s32.totalorder %s59, %s75
    %p77 = scmp.eq.s32.totalorder %s16, 0
    %p78 = por %p76, %p77
    %s80 = sadd.s32 %s79, 1
    %p83 = scmp.eq.s32.totalorder %s10, 1
    %p84 = scmp.ne.s32.totalorder %s79, %s81
    %p85 = scmp.eq.s32.totalorder %s10, 0
    %p86 = por %p84, %p85
    %p87 = scmp.ne.s32.totalorder %s79, %s81
    %p88 = scmp.eq.s32.totalorder %s15, 1
    %p89 = por %p87, %p88
    %p90 = scmp.ne.s32.totalorder %s81, %s82
    %p91 = scmp.eq.s32.totalorder %s15, 0
    %p92 = por %p90, %p91
    %p93 = scmp.ne.s32.totalorder %s81, %s82
    %p94 = scmp.eq.s32.totalorder %s16, 1
    %p95 = por %p93, %p94
    %p97 = scmp.ne.s32.totalorder %s82, %s96
    %p98 = scmp.eq.s32.totalorder %s16, 0
    %p99 = por %p97, %p98
    %s101 = sadd.s32 %s100, 1
    %p104 = scmp.eq.s32.totalorder %s10, 1
    %p105 = scmp.ne.s32.totalorder %s100, %s102
    %p106 = scmp.eq.s32.totalorder %s10, 0
    %p107 = por %p105, %p106
    %p108 = scmp.ne.s32.totalorder %s100, %s102
    %p109 = scmp.eq.s32.totalorder %s15, 1
    %p110 = por %p108, %p109
    %p111 = scmp.ne.s32.totalorder %s102, %s103
    %p112 = scmp.eq.s32.totalorder %s15, 0
    %p113 = por %p111, %p112
    %p114 = scmp.ne.s32.totalorder %s102, %s103
    %p115 = scmp.eq.s32.totalorder %s16, 1
    %p116 = por %p114, %p115
    %p118 = scmp.ne.s32.totalorder %s103, %s117
    %p119 = scmp.eq.s32.totalorder %s16, 0
    %p120 = por %p118, %p119
    %s121 = ssub.s32 %s17, %s29
    %s122 = ssub.s32 %s18, %s25
    %s123 = sor.u32 %s121, %s122
    %p124 = scmp.eq.s32.totalorder %s123, 0
    %s126 = sadd.s32 %s125, 1
    %s127 = scalar_select %p124, %s125, %s126
    %p130 = pneg %p124
    %p131 = scmp.eq.s32.totalorder %s10, 1
    %p132 = por %p130, %p131
    %p133 = scmp.ne.s32.totalorder %s125, %s128
    %p134 = scmp.eq.s32.totalorder %s10, 0
    %p135 = por %p133, %p134
    %p136 = scmp.ne.s32.totalorder %s125, %s128
    %p137 = scmp.eq.s32.totalorder %s15, 1
    %p138 = por %p136, %p137
    %p139 = scmp.ne.s32.totalorder %s128, %s129
    %p140 = scmp.eq.s32.totalorder %s15, 0
    %p141 = por %p139, %p140
    %p142 = scmp.ne.s32.totalorder %s128, %s129
    %p143 = scmp.eq.s32.totalorder %s16, 1
    %p144 = por %p142, %p143
    %p146 = scmp.ne.s32.totalorder %s129, %s145
    %p147 = scmp.eq.s32.totalorder %s16, 0
    %p148 = por %p146, %p147
    %p149 = scmp.le.s32.totalorder 1, %s10
    %p150 = scmp.lt.s32.totalorder %s10, 3
    %p151 = pnand %p149, %p150
    %p152 = pneg %p151
    // Predicated region
    $region9: #{conv_transpose_block.1} parent=5 // pred_check
      _
    $region10: #{conv_transpose_block.1} parent=5 // pred_check_branch
      %154 = sbr.rel (%p151) target = $region12
    $region11: #{conv_transpose_block.1} parent=5 // pred_region
      %s155 = ssub.s32 %s10, 1
      // Predicated region
      $region13: #{conv_transpose_block.1} parent=11 // pred_check
        %p156 = pneg %p43
      $region14: #{conv_transpose_block.1} parent=11 // pred_check_branch
        %158 = sbr.rel (%p156) target = $region16
      $region15: #{conv_transpose_block.1} parent=11 // pred_region
        _
      $region16: #{conv_transpose_block.1} parent=11 // pred_fallthru
        _
      // Predicated region
      $region17: #{conv_transpose_block.1} parent=11 // pred_check
        %p159 = pneg %p92
      $region18: #{conv_transpose_block.1} parent=11 // pred_check_branch
        %161 = sbr.rel (%p159) target = $region20
      $region19: #{conv_transpose_block.1} parent=11 // pred_region
        _
      $region20: #{conv_transpose_block.1} parent=11 // pred_fallthru
        _
      // Predicated region
      $region21: #{conv_transpose_block.1} parent=11 // pred_check
        %p162 = pneg %p113
      $region22: #{conv_transpose_block.1} parent=11 // pred_check_branch
        %164 = sbr.rel (%p162) target = $region24
      $region23: #{conv_transpose_block.1} parent=11 // pred_region
        _
      $region24: #{conv_transpose_block.1} parent=11 // pred_fallthru
        _
    $region12: #{conv_transpose_block.1} parent=5 // pred_fallthru
      _
    %p165 = scmp.lt.s32.totalorder %s10, 2
    // Predicated region
    $region25: #{conv_transpose_block.1} parent=5 // pred_check
      %p166 = pneg %p165
    $region26: #{conv_transpose_block.1} parent=5 // pred_check_branch
      %168 = sbr.rel (%p166) target = $region28
    $region27: #{conv_transpose_block.1} parent=5 // pred_region
      // Predicated region
      $region29: #{conv_transpose_block.1} parent=27 // pred_check
        %p169 = pneg %p65
      $region30: #{conv_transpose_block.1} parent=27 // pred_check_branch
        %171 = sbr.rel (%p169) target = $region32
      $region31: #{conv_transpose_block.1} parent=27 // pred_region
        %s172 = smul.u32 4, %s18
        %p173 = scmp.lt.s32.totalorder %s17, 1
        %s174 = scalar_select %p173, %s17, 1
        %p175 = scmp.lt.s32.totalorder %s172, 3
        %s176 = scalar_select %p175, %s172, 3
        %s177 = smul.addr %s174, 16
        %s178 = sadd.s32 %s176, %s177
        %s179 = smul.addr %s178, 8
        %s180 = scalar_lea.vmem %s1, %s179
        %s181 = smul.u32 4, %s18
      $region32: #{conv_transpose_block.1} parent=27 // pred_fallthru
        _
    $region28: #{conv_transpose_block.1} parent=5 // pred_fallthru
      _
    %p182 = scmp.le.s32.totalorder 1, %s10
    %p183 = scmp.lt.s32.totalorder %s10, 3
    %p184 = pnand %p182, %p183
    %p185 = pneg %p184
    // Predicated region
    $region33: #{conv_transpose_block.1} parent=5 // pred_check
      _
    $region34: #{conv_transpose_block.1} parent=5 // pred_check_branch
      %187 = sbr.rel (%p184) target = $region36
    $region35: #{conv_transpose_block.1} parent=5 // pred_region
      %s188 = ssub.s32 %s10, 1
      %p189 = pneg %p43
      %p190 = pneg %p40
      %s191 = smul.u32 4, %s20
      %p192 = scmp.lt.s32.totalorder %s19, 1
      %s193 = scalar_select %p192, %s19, 1
      %p194 = scmp.lt.s32.totalorder %s191, 3
      %s195 = scalar_select %p194, %s191, 3
      %s196 = smul.addr %s193, 16
      %s197 = sadd.s32 %s195, %s196
      %s198 = smul.addr %s197, 8
      %s199 = scalar_lea.vmem %s1, %s198
      %p200 = pneg %p71
      %p201 = pneg %p68
      %p202 = pneg %p92
      %p203 = pneg %p89
      %p204 = pneg %p113
      %p205 = pneg %p110
      %p206 = pneg %p141
      %p207 = pneg %p138
      %s208 = smul.u32 4, %s20
      %p209 = scmp.lt.s32.totalorder %s19, 1
      %s210 = scalar_select %p209, %s19, 1
      %p211 = scmp.lt.s32.totalorder %s208, 3
      %s212 = scalar_select %p211, %s208, 3
      %s213 = smul.addr %s210, 64
      %s214 = sadd.s32 %s212, %s213
      %s215 = smul.addr %s214, 8
      %s216 = scalar_lea.vmem %s4, %s215
      %s217 = smul.u32 4, %s20
      %p218 = scmp.lt.s32.totalorder %s19, 1
      %s219 = scalar_select %p218, %s19, 1
      %p220 = scmp.lt.s32.totalorder %s217, 3
      %s221 = scalar_select %p220, %s217, 3
      %s222 = smul.addr %s219, 16
      %s223 = sadd.s32 %s221, %s222
      %s224 = smul.addr %s223, 8
      %s225 = scalar_lea.vmem %s1, %s224
      %s226 = smul.u32 4, %s20
      %s227 = smul.u32 4, %s20
      %p228 = scmp.lt.s32.totalorder %s19, 1
      %s229 = scalar_select %p228, %s19, 1
      %p230 = scmp.lt.s32.totalorder %s227, 3
      %s231 = scalar_select %p230, %s227, 3
      %s232 = smul.addr %s229, 64
      %s233 = sadd.s32 %s231, %s232
      %s234 = smul.addr %s233, 8
      %s235 = scalar_lea.vmem %s4, %s234
      %s236 = smul.u32 4, %s20
      %v238 = vld [vmem:[%s0] sm:$0xf]
      %v239 = vld [vmem:[%s0 + $0x4] sm:$0xf]
      %v240 = vld [vmem:[%s0 + $0x8] sm:$0xf]
      %v241 = vld [vmem:[%s0 + $0xc] sm:$0xf]
      %v242 = vld [vmem:[%s0 + $0x10] sm:$0xf]
      %v243 = vld [vmem:[%s0 + $0x14] sm:$0xf]
      %v244 = vld [vmem:[%s0 + $0x18] sm:$0xf]
      %v245 = vld [vmem:[%s0 + $0x1c] sm:$0xf]
      %v246 = vld [vmem:[%s0 + $0x20] sm:$0xf]
      %v247 = vld [vmem:[%s0 + $0x24] sm:$0xf]
      %v248 = vld [vmem:[%s0 + $0x28] sm:$0xf]
      %v249 = vld [vmem:[%s0 + $0x2c] sm:$0xf]
      %v250 = vld [vmem:[%s0 + $0x30] sm:$0xf]
      %v251 = vld [vmem:[%s0 + $0x34] sm:$0xf]
      %v252 = vld [vmem:[%s0 + $0x38] sm:$0xf]
      %v253 = vld [vmem:[%s0 + $0x3c] sm:$0xf]
      %v254 = vld [vmem:[%s225] sm:$0xff]
      %v255 = vld [vmem:[%s225 + $0x8] sm:$0xff]
      %v256 = vld [vmem:[%s225 + $0x10] sm:$0xff]
      %v257 = vld [vmem:[%s225 + $0x18] sm:$0xff]
      %v258 = vld [vmem:[%s225 + $0x20] sm:$0xff]
      %v259 = vld [vmem:[%s225 + $0x28] sm:$0xff]
      %v260 = vld [vmem:[%s225 + $0x30] sm:$0xff]
      %v261 = vld [vmem:[%s225 + $0x38] sm:$0xff]
      %v262 = vld [vmem:[%s225 + $0x40] sm:$0xff]
      %v263 = vld [vmem:[%s225 + $0x48] sm:$0xff]
      %v264 = vld [vmem:[%s225 + $0x50] sm:$0xff]
      %v265 = vld [vmem:[%s225 + $0x58] sm:$0xff]
      %v266 = vld [vmem:[%s225 + $0x60] sm:$0xff]
      %v267 = vld [vmem:[%s225 + $0x68] sm:$0xff]
      %v268 = vld [vmem:[%s225 + $0x70] sm:$0xff]
      %v269 = vld [vmem:[%s225 + $0x78] sm:$0xff]
      %v270 = vpack.c.bf16 %v258, %v254
      %v271 = vpack.c.bf16 %v259, %v255
      %v272 = vpack.c.bf16 %v260, %v256
      %v273 = vpack.c.bf16 %v261, %v257
      %v274 = vpack.c.bf16 %v266, %v262
      %v275 = vpack.c.bf16 %v267, %v263
      %v276 = vpack.c.bf16 %v268, %v264
      %v277 = vpack.c.bf16 %v269, %v265
      %v278 = vld [vmem:[%s2] sm:$0xff]
      %v279 = vld [vmem:[%s2 + $0x8] sm:$0xff]
      %v280 = vld [vmem:[%s2 + $0x10] sm:$0xff]
      %v281 = vld [vmem:[%s2 + $0x18] sm:$0xff]
      %v282 = vld [vmem:[%s2 + $0x20] sm:$0xff]
      %v283 = vld [vmem:[%s2 + $0x28] sm:$0xff]
      %v284 = vld [vmem:[%s2 + $0x30] sm:$0xff]
      %v285 = vld [vmem:[%s2 + $0x38] sm:$0xff]
      %v286 = vld [vmem:[%s2 + $0x40] sm:$0xff]
      %v287 = vld [vmem:[%s2 + $0x48] sm:$0xff]
      %v288 = vld [vmem:[%s2 + $0x50] sm:$0xff]
      %v289 = vld [vmem:[%s2 + $0x58] sm:$0xff]
      %v290 = vld [vmem:[%s2 + $0x60] sm:$0xff]
      %v291 = vld [vmem:[%s2 + $0x68] sm:$0xff]
      %v292 = vld [vmem:[%s2 + $0x70] sm:$0xff]
      %v293 = vld [vmem:[%s2 + $0x78] sm:$0xff]
      %295 = vset.pattern.permute.xlu0 0
      %296 = vperm.xlu0 %295, %v278
      %v297 = vpop.permute.xlu0 %296
      %300 = vset.pattern.permute.xlu0 0
      %301 = vperm.xlu0 %300, %v279
      %v302 = vpop.permute.xlu0 %301
      %305 = vset.pattern.permute.xlu0 0
      %306 = vperm.xlu0 %305, %v280
      %v307 = vpop.permute.xlu0 %306
      %310 = vset.pattern.permute.xlu0 0
      %311 = vperm.xlu0 %310, %v281
      %v312 = vpop.permute.xlu0 %311
      %315 = vset.pattern.permute.xlu0 0
      %316 = vperm.xlu0 %315, %v282
      %v317 = vpop.permute.xlu0 %316
      %320 = vset.pattern.permute.xlu0 0
      %321 = vperm.xlu0 %320, %v283
      %v322 = vpop.permute.xlu0 %321
      %325 = vset.pattern.permute.xlu0 0
      %326 = vperm.xlu0 %325, %v284
      %v327 = vpop.permute.xlu0 %326
      %330 = vset.pattern.permute.xlu0 0
      %331 = vperm.xlu0 %330, %v285
      %v332 = vpop.permute.xlu0 %331
      %335 = vset.pattern.permute.xlu0 0
      %336 = vperm.xlu0 %335, %v286
      %v337 = vpop.permute.xlu0 %336
      %340 = vset.pattern.permute.xlu0 0
      %341 = vperm.xlu0 %340, %v287
      %v342 = vpop.permute.xlu0 %341
      %345 = vset.pattern.permute.xlu0 0
      %346 = vperm.xlu0 %345, %v288
      %v347 = vpop.permute.xlu0 %346
      %350 = vset.pattern.permute.xlu0 0
      %351 = vperm.xlu0 %350, %v289
      %v352 = vpop.permute.xlu0 %351
      %355 = vset.pattern.permute.xlu0 0
      %356 = vperm.xlu0 %355, %v290
      %v357 = vpop.permute.xlu0 %356
      %360 = vset.pattern.permute.xlu0 0
      %361 = vperm.xlu0 %360, %v291
      %v362 = vpop.permute.xlu0 %361
      %365 = vset.pattern.permute.xlu0 0
      %366 = vperm.xlu0 %365, %v292
      %v367 = vpop.permute.xlu0 %366
      %370 = vset.pattern.permute.xlu0 0
      %371 = vperm.xlu0 %370, %v293
      %v372 = vpop.permute.xlu0 %371
      %v390 = vunpack.c.l.b16 %v238
      %v391 = vunpack.c.l.b16 %v239
      %v392 = vunpack.c.l.b16 %v240
      %v393 = vunpack.c.l.b16 %v241
      %v394 = vunpack.c.l.b16 %v242
      %v395 = vunpack.c.l.b16 %v243
      %v396 = vunpack.c.l.b16 %v244
      %v397 = vunpack.c.l.b16 %v245
      %v398 = vunpack.c.l.b16 %v246
      %v399 = vunpack.c.l.b16 %v247
      %v400 = vunpack.c.l.b16 %v248
      %v401 = vunpack.c.l.b16 %v249
      %v402 = vunpack.c.l.b16 %v250
      %v403 = vunpack.c.l.b16 %v251
      %v404 = vunpack.c.l.b16 %v252
      %v405 = vunpack.c.l.b16 %v253
      %v406 = vpack.c.b16 %v391, %v390
      %v407 = vpack.c.b16 %v393, %v392
      %v408 = vpack.c.b16 %v395, %v394
      %v409 = vpack.c.b16 %v397, %v396
      %v410 = vpack.c.b16 %v399, %v398
      %v411 = vpack.c.b16 %v401, %v400
      %v412 = vpack.c.b16 %v403, %v402
      %v413 = vpack.c.b16 %v405, %v404
      %vm414 = vcmask 261120
      %v416 = vsel %vm414, %v406, 0
      %v419 = vsel %vm414, %v407, 0
      %v422 = vsel %vm414, %v408, 0
      %v425 = vsel %vm414, %v409, 0
      %v428 = vsel %vm414, %v410, 0
      %v431 = vsel %vm414, %v411, 0
      %v434 = vsel %vm414, %v412, 0
      %v437 = vsel %vm414, %v413, 0
      %439 = vmatpush.bf16.msra.mxu0 0
      %440 = vmatpush.bf16.msra.mxu0 0
      %441 = vmatpush.bf16.msra.mxu0 0
      %442 = vmatpush.bf16.msra.mxu0 0
      %443 = vmatpush.bf16.msra.mxu0 0
      %444 = vmatpush.bf16.msra.mxu0 0
      %445 = vmatpush.bf16.msra.mxu0 %v274
      %446 = vmatpush.bf16.msra.mxu0 %v270
      %447 = vmatmul.bf16.gmra.mxu0 %v416
      %v448 = vpop.f32.mrf.mxu0
      %v449 = vadd.f32 %v297, %v448
      %v450 = vpop.f32.mrf.mxu0
      %v451 = vadd.f32 %v302, %v450
      %452 = vmatmul.bf16.gmra.mxu0 %v419
      %v453 = vpop.f32.mrf.mxu0
      %v454 = vadd.f32 %v307, %v453
      %v455 = vpop.f32.mrf.mxu0
      %v456 = vadd.f32 %v312, %v455
      %457 = vmatmul.bf16.gmra.mxu0 %v422
      %v458 = vpop.f32.mrf.mxu0
      %v459 = vadd.f32 %v317, %v458
      %v460 = vpop.f32.mrf.mxu0
      %v461 = vadd.f32 %v322, %v460
      %462 = vmatmul.bf16.gmra.mxu0 %v425
      %v463 = vpop.f32.mrf.mxu0
      %v464 = vadd.f32 %v327, %v463
      %v465 = vpop.f32.mrf.mxu0
      %v466 = vadd.f32 %v332, %v465
      %467 = vmatmul.bf16.gmra.mxu0 %v428
      %v468 = vpop.f32.mrf.mxu0
      %v469 = vadd.f32 %v337, %v468
      %v470 = vpop.f32.mrf.mxu0
      %v471 = vadd.f32 %v342, %v470
      %472 = vmatmul.bf16.gmra.mxu0 %v431
      %v473 = vpop.f32.mrf.mxu0
      %v474 = vadd.f32 %v347, %v473
      %v475 = vpop.f32.mrf.mxu0
      %v476 = vadd.f32 %v352, %v475
      %477 = vmatmul.bf16.gmra.mxu0 %v434
      %v478 = vpop.f32.mrf.mxu0
      %v479 = vadd.f32 %v357, %v478
      %v480 = vpop.f32.mrf.mxu0
      %v481 = vadd.f32 %v362, %v480
      %482 = vmatmul.bf16.gmra.mxu0 %v437
      %v483 = vpop.f32.mrf.mxu0
      %v484 = vadd.f32 %v367, %v483
      %v485 = vpop.f32.mrf.mxu0
      %v486 = vadd.f32 %v372, %v485
      %487 = vdwg.mxu0
      %488 = vmatpush.bf16.msra.mxu0 0
      %489 = vmatpush.bf16.msra.mxu0 0
      %490 = vmatpush.bf16.msra.mxu0 0
      %491 = vmatpush.bf16.msra.mxu0 0
      %492 = vmatpush.bf16.msra.mxu0 0
      %493 = vmatpush.bf16.msra.mxu0 0
      %494 = vmatpush.bf16.msra.mxu0 %v275
      %495 = vmatpush.bf16.msra.mxu0 %v271
      %496 = vmatmul.bf16.gmra.mxu0 %v416
      %v497 = vpop.f32.mrf.mxu0
      %v498 = vadd.f32 %v297, %v497
      %v499 = vpop.f32.mrf.mxu0
      %v500 = vadd.f32 %v302, %v499
      %501 = vmatmul.bf16.gmra.mxu0 %v419
      %v502 = vpop.f32.mrf.mxu0
      %v503 = vadd.f32 %v307, %v502
      %v504 = vpop.f32.mrf.mxu0
      %v505 = vadd.f32 %v312, %v504
      %506 = vmatmul.bf16.gmra.mxu0 %v422
      %v507 = vpop.f32.mrf.mxu0
      %v508 = vadd.f32 %v317, %v507
      %v509 = vpop.f32.mrf.mxu0
      %v510 = vadd.f32 %v322, %v509
      %511 = vmatmul.bf16.gmra.mxu0 %v425
      %v512 = vpop.f32.mrf.mxu0
      %v513 = vadd.f32 %v327, %v512
      %v514 = vpop.f32.mrf.mxu0
      %v515 = vadd.f32 %v332, %v514
      %516 = vmatmul.bf16.gmra.mxu0 %v428
      %v517 = vpop.f32.mrf.mxu0
      %v518 = vadd.f32 %v337, %v517
      %v519 = vpop.f32.mrf.mxu0
      %v520 = vadd.f32 %v342, %v519
      %521 = vmatmul.bf16.gmra.mxu0 %v431
      %v522 = vpop.f32.mrf.mxu0
      %v523 = vadd.f32 %v347, %v522
      %v524 = vpop.f32.mrf.mxu0
      %v525 = vadd.f32 %v352, %v524
      %526 = vmatmul.bf16.gmra.mxu0 %v434
      %v527 = vpop.f32.mrf.mxu0
      %v528 = vadd.f32 %v357, %v527
      %v529 = vpop.f32.mrf.mxu0
      %v530 = vadd.f32 %v362, %v529
      %531 = vmatmul.bf16.gmra.mxu0 %v437
      %v532 = vpop.f32.mrf.mxu0
      %v533 = vadd.f32 %v367, %v532
      %v534 = vpop.f32.mrf.mxu0
      %v535 = vadd.f32 %v372, %v534
      %536 = vdwg.mxu0
      %537 = vmatpush.bf16.msra.mxu0 0
      %538 = vmatpush.bf16.msra.mxu0 0
      %539 = vmatpush.bf16.msra.mxu0 0
      %540 = vmatpush.bf16.msra.mxu0 0
      %541 = vmatpush.bf16.msra.mxu0 0
      %542 = vmatpush.bf16.msra.mxu0 0
      %543 = vmatpush.bf16.msra.mxu0 %v276
      %544 = vmatpush.bf16.msra.mxu0 %v272
      %545 = vmatmul.bf16.gmra.mxu0 %v416
      %v546 = vpop.f32.mrf.mxu0
      %v547 = vadd.f32 %v297, %v546
      %v548 = vpop.f32.mrf.mxu0
      %v549 = vadd.f32 %v302, %v548
      %550 = vmatmul.bf16.gmra.mxu0 %v419
      %v551 = vpop.f32.mrf.mxu0
      %v552 = vadd.f32 %v307, %v551
      %v553 = vpop.f32.mrf.mxu0
      %v554 = vadd.f32 %v312, %v553
      %555 = vmatmul.bf16.gmra.mxu0 %v422
      %v556 = vpop.f32.mrf.mxu0
      %v557 = vadd.f32 %v317, %v556
      %v558 = vpop.f32.mrf.mxu0
      %v559 = vadd.f32 %v322, %v558
      %560 = vmatmul.bf16.gmra.mxu0 %v425
      %v561 = vpop.f32.mrf.mxu0
      %v562 = vadd.f32 %v327, %v561
      %v563 = vpop.f32.mrf.mxu0
      %v564 = vadd.f32 %v332, %v563
      %565 = vmatmul.bf16.gmra.mxu0 %v428
      %v566 = vpop.f32.mrf.mxu0
      %v567 = vadd.f32 %v337, %v566
      %v568 = vpop.f32.mrf.mxu0
      %v569 = vadd.f32 %v342, %v568
      %570 = vmatmul.bf16.gmra.mxu0 %v431
      %v571 = vpop.f32.mrf.mxu0
      %v572 = vadd.f32 %v347, %v571
      %v573 = vpop.f32.mrf.mxu0
      %v574 = vadd.f32 %v352, %v573
      %575 = vmatmul.bf16.gmra.mxu0 %v434
      %v576 = vpop.f32.mrf.mxu0
      %v577 = vadd.f32 %v357, %v576
      %v578 = vpop.f32.mrf.mxu0
      %v579 = vadd.f32 %v362, %v578
      %580 = vmatmul.bf16.gmra.mxu0 %v437
      %v581 = vpop.f32.mrf.mxu0
      %v582 = vadd.f32 %v367, %v581
      %v583 = vpop.f32.mrf.mxu0
      %v584 = vadd.f32 %v372, %v583
      %585 = vdwg.mxu0
      %586 = vmatpush.bf16.msra.mxu0 0
      %587 = vmatpush.bf16.msra.mxu0 0
      %588 = vmatpush.bf16.msra.mxu0 0
      %589 = vmatpush.bf16.msra.mxu0 0
      %590 = vmatpush.bf16.msra.mxu0 0
      %591 = vmatpush.bf16.msra.mxu0 0
      %592 = vmatpush.bf16.msra.mxu0 %v277
      %593 = vmatpush.bf16.msra.mxu0 %v273
      %594 = vmatmul.bf16.gmra.mxu0 %v416
      %v595 = vpop.f32.mrf.mxu0
      %v596 = vadd.f32 %v297, %v595
      %v597 = vpop.f32.mrf.mxu0
      %v598 = vadd.f32 %v302, %v597
      %599 = vmatmul.bf16.gmra.mxu0 %v419
      %v600 = vpop.f32.mrf.mxu0
      %v601 = vadd.f32 %v307, %v600
      %v602 = vpop.f32.mrf.mxu0
      %v603 = vadd.f32 %v312, %v602
      %604 = vmatmul.bf16.gmra.mxu0 %v422
      %v605 = vpop.f32.mrf.mxu0
      %v606 = vadd.f32 %v317, %v605
      %v607 = vpop.f32.mrf.mxu0
      %v608 = vadd.f32 %v322, %v607
      %609 = vmatmul.bf16.gmra.mxu0 %v425
      %v610 = vpop.f32.mrf.mxu0
      %v611 = vadd.f32 %v327, %v610
      %v612 = vpop.f32.mrf.mxu0
      %v613 = vadd.f32 %v332, %v612
      %614 = vmatmul.bf16.gmra.mxu0 %v428
      %v615 = vpop.f32.mrf.mxu0
      %v616 = vadd.f32 %v337, %v615
      %v617 = vpop.f32.mrf.mxu0
      %v618 = vadd.f32 %v342, %v617
      %619 = vmatmul.bf16.gmra.mxu0 %v431
      %v620 = vpop.f32.mrf.mxu0
      %v621 = vadd.f32 %v347, %v620
      %v622 = vpop.f32.mrf.mxu0
      %v623 = vadd.f32 %v352, %v622
      %624 = vmatmul.bf16.gmra.mxu0 %v434
      %v625 = vpop.f32.mrf.mxu0
      %v626 = vadd.f32 %v357, %v625
      %v627 = vpop.f32.mrf.mxu0
      %v628 = vadd.f32 %v362, %v627
      %629 = vmatmul.bf16.gmra.mxu0 %v437
      %v630 = vpop.f32.mrf.mxu0
      %v631 = vadd.f32 %v367, %v630
      %v632 = vpop.f32.mrf.mxu0
      %v633 = vadd.f32 %v372, %v632
      %634 = vdwg.mxu0
      %vm635 = vcmp.ge.f32.partialorder %v449, 0.0
      %vm636 = vcmp.ge.f32.partialorder %v498, 0.0
      %vm637 = vcmp.ge.f32.partialorder %v547, 0.0
      %vm638 = vcmp.ge.f32.partialorder %v596, 0.0
      %vm639 = vcmp.ge.f32.partialorder %v451, 0.0
      %vm640 = vcmp.ge.f32.partialorder %v500, 0.0
      %vm641 = vcmp.ge.f32.partialorder %v549, 0.0
      %vm642 = vcmp.ge.f32.partialorder %v598, 0.0
      %vm643 = vcmp.ge.f32.partialorder %v454, 0.0
      %vm644 = vcmp.ge.f32.partialorder %v503, 0.0
      %vm645 = vcmp.ge.f32.partialorder %v552, 0.0
      %vm646 = vcmp.ge.f32.partialorder %v601, 0.0
      %vm647 = vcmp.ge.f32.partialorder %v456, 0.0
      %vm648 = vcmp.ge.f32.partialorder %v505, 0.0
      %vm649 = vcmp.ge.f32.partialorder %v554, 0.0
      %vm650 = vcmp.ge.f32.partialorder %v603, 0.0
      %vm651 = vcmp.ge.f32.partialorder %v459, 0.0
      %vm652 = vcmp.ge.f32.partialorder %v508, 0.0
      %vm653 = vcmp.ge.f32.partialorder %v557, 0.0
      %vm654 = vcmp.ge.f32.partialorder %v606, 0.0
      %vm655 = vcmp.ge.f32.partialorder %v461, 0.0
      %vm656 = vcmp.ge.f32.partialorder %v510, 0.0
      %vm657 = vcmp.ge.f32.partialorder %v559, 0.0
      %vm658 = vcmp.ge.f32.partialorder %v608, 0.0
      %vm659 = vcmp.ge.f32.partialorder %v464, 0.0
      %vm660 = vcmp.ge.f32.partialorder %v513, 0.0
      %vm661 = vcmp.ge.f32.partialorder %v562, 0.0
      %vm662 = vcmp.ge.f32.partialorder %v611, 0.0
      %vm663 = vcmp.ge.f32.partialorder %v466, 0.0
      %vm664 = vcmp.ge.f32.partialorder %v515, 0.0
      %vm665 = vcmp.ge.f32.partialorder %v564, 0.0
      %vm666 = vcmp.ge.f32.partialorder %v613, 0.0
      %vm667 = vcmp.ge.f32.partialorder %v469, 0.0
      %vm668 = vcmp.ge.f32.partialorder %v518, 0.0
      %vm669 = vcmp.ge.f32.partialorder %v567, 0.0
      %vm670 = vcmp.ge.f32.partialorder %v616, 0.0
      %vm671 = vcmp.ge.f32.partialorder %v471, 0.0
      %vm672 = vcmp.ge.f32.partialorder %v520, 0.0
      %vm673 = vcmp.ge.f32.partialorder %v569, 0.0
      %vm674 = vcmp.ge.f32.partialorder %v618, 0.0
      %vm675 = vcmp.ge.f32.partialorder %v474, 0.0
      %vm676 = vcmp.ge.f32.partialorder %v523, 0.0
      %vm677 = vcmp.ge.f32.partialorder %v572, 0.0
      %vm678 = vcmp.ge.f32.partialorder %v621, 0.0
      %vm679 = vcmp.ge.f32.partialorder %v476, 0.0
      %vm680 = vcmp.ge.f32.partialorder %v525, 0.0
      %vm681 = vcmp.ge.f32.partialorder %v574, 0.0
      %vm682 = vcmp.ge.f32.partialorder %v623, 0.0
      %vm683 = vcmp.ge.f32.partialorder %v479, 0.0
      %vm684 = vcmp.ge.f32.partialorder %v528, 0.0
      %vm685 = vcmp.ge.f32.partialorder %v577, 0.0
      %vm686 = vcmp.ge.f32.partialorder %v626, 0.0
      %vm687 = vcmp.ge.f32.partialorder %v481, 0.0
      %vm688 = vcmp.ge.f32.partialorder %v530, 0.0
      %vm689 = vcmp.ge.f32.partialorder %v579, 0.0
      %vm690 = vcmp.ge.f32.partialorder %v628, 0.0
      %vm691 = vcmp.ge.f32.partialorder %v484, 0.0
      %vm692 = vcmp.ge.f32.partialorder %v533, 0.0
      %vm693 = vcmp.ge.f32.partialorder %v582, 0.0
      %vm694 = vcmp.ge.f32.partialorder %v631, 0.0
      %vm695 = vcmp.ge.f32.partialorder %v486, 0.0
      %vm696 = vcmp.ge.f32.partialorder %v535, 0.0
      %vm697 = vcmp.ge.f32.partialorder %v584, 0.0
      %vm698 = vcmp.ge.f32.partialorder %v633, 0.0
      %v699 = vld [vmem:[%s3] sm:$0xff]
      %v700 = vld [vmem:[%s3 + $0x8] sm:$0xff]
      %v701 = vld [vmem:[%s3 + $0x10] sm:$0xff]
      %v702 = vld [vmem:[%s3 + $0x18] sm:$0xff]
      %v703 = vld [vmem:[%s3 + $0x20] sm:$0xff]
      %v704 = vld [vmem:[%s3 + $0x28] sm:$0xff]
      %v705 = vld [vmem:[%s3 + $0x30] sm:$0xff]
      %v706 = vld [vmem:[%s3 + $0x38] sm:$0xff]
      %v707 = vld [vmem:[%s3 + $0x40] sm:$0xff]
      %v708 = vld [vmem:[%s3 + $0x48] sm:$0xff]
      %v709 = vld [vmem:[%s3 + $0x50] sm:$0xff]
      %v710 = vld [vmem:[%s3 + $0x58] sm:$0xff]
      %v711 = vld [vmem:[%s3 + $0x60] sm:$0xff]
      %v712 = vld [vmem:[%s3 + $0x68] sm:$0xff]
      %v713 = vld [vmem:[%s3 + $0x70] sm:$0xff]
      %v714 = vld [vmem:[%s3 + $0x78] sm:$0xff]
      %716 = vset.pattern.permute.xlu0 0
      %717 = vperm.xlu0 %716, %v699
      %v718 = vpop.permute.xlu0 %717
      %721 = vset.pattern.permute.xlu0 0
      %722 = vperm.xlu0 %721, %v700
      %v723 = vpop.permute.xlu0 %722
      %726 = vset.pattern.permute.xlu0 0
      %727 = vperm.xlu0 %726, %v701
      %v728 = vpop.permute.xlu0 %727
      %731 = vset.pattern.permute.xlu0 0
      %732 = vperm.xlu0 %731, %v702
      %v733 = vpop.permute.xlu0 %732
      %736 = vset.pattern.permute.xlu0 0
      %737 = vperm.xlu0 %736, %v703
      %v738 = vpop.permute.xlu0 %737
      %741 = vset.pattern.permute.xlu0 0
      %742 = vperm.xlu0 %741, %v704
      %v743 = vpop.permute.xlu0 %742
      %746 = vset.pattern.permute.xlu0 0
      %747 = vperm.xlu0 %746, %v705
      %v748 = vpop.permute.xlu0 %747
      %751 = vset.pattern.permute.xlu0 0
      %752 = vperm.xlu0 %751, %v706
      %v753 = vpop.permute.xlu0 %752
      %756 = vset.pattern.permute.xlu0 0
      %757 = vperm.xlu0 %756, %v707
      %v758 = vpop.permute.xlu0 %757
      %761 = vset.pattern.permute.xlu0 0
      %762 = vperm.xlu0 %761, %v708
      %v763 = vpop.permute.xlu0 %762
      %766 = vset.pattern.permute.xlu0 0
      %767 = vperm.xlu0 %766, %v709
      %v768 = vpop.permute.xlu0 %767
      %771 = vset.pattern.permute.xlu0 0
      %772 = vperm.xlu0 %771, %v710
      %v773 = vpop.permute.xlu0 %772
      %776 = vset.pattern.permute.xlu0 0
      %777 = vperm.xlu0 %776, %v711
      %v778 = vpop.permute.xlu0 %777
      %781 = vset.pattern.permute.xlu0 0
      %782 = vperm.xlu0 %781, %v712
      %v783 = vpop.permute.xlu0 %782
      %786 = vset.pattern.permute.xlu0 0
      %787 = vperm.xlu0 %786, %v713
      %v788 = vpop.permute.xlu0 %787
      %791 = vset.pattern.permute.xlu0 0
      %792 = vperm.xlu0 %791, %v714
      %v793 = vpop.permute.xlu0 %792
      %v795 = vmul.f32 %v718, %v449
      %v796 = vmul.f32 %v718, %v498
      %v797 = vmul.f32 %v718, %v547
      %v798 = vmul.f32 %v718, %v596
      %v799 = vmul.f32 %v723, %v451
      %v800 = vmul.f32 %v723, %v500
      %v801 = vmul.f32 %v723, %v549
      %v802 = vmul.f32 %v723, %v598
      %v803 = vmul.f32 %v728, %v454
      %v804 = vmul.f32 %v728, %v503
      %v805 = vmul.f32 %v728, %v552
      %v806 = vmul.f32 %v728, %v601
      %v807 = vmul.f32 %v733, %v456
      %v808 = vmul.f32 %v733, %v505
      %v809 = vmul.f32 %v733, %v554
      %v810 = vmul.f32 %v733, %v603
      %v811 = vmul.f32 %v738, %v459
      %v812 = vmul.f32 %v738, %v508
      %v813 = vmul.f32 %v738, %v557
      %v814 = vmul.f32 %v738, %v606
      %v815 = vmul.f32 %v743, %v461
      %v816 = vmul.f32 %v743, %v510
      %v817 = vmul.f32 %v743, %v559
      %v818 = vmul.f32 %v743, %v608
      %v819 = vmul.f32 %v748, %v464
      %v820 = vmul.f32 %v748, %v513
      %v821 = vmul.f32 %v748, %v562
      %v822 = vmul.f32 %v748, %v611
      %v823 = vmul.f32 %v753, %v466
      %v824 = vmul.f32 %v753, %v515
      %v825 = vmul.f32 %v753, %v564
      %v826 = vmul.f32 %v753, %v613
      %v827 = vmul.f32 %v758, %v469
      %v828 = vmul.f32 %v758, %v518
      %v829 = vmul.f32 %v758, %v567
      %v830 = vmul.f32 %v758, %v616
      %v831 = vmul.f32 %v763, %v471
      %v832 = vmul.f32 %v763, %v520
      %v833 = vmul.f32 %v763, %v569
      %v834 = vmul.f32 %v763, %v618
      %v835 = vmul.f32 %v768, %v474
      %v836 = vmul.f32 %v768, %v523
      %v837 = vmul.f32 %v768, %v572
      %v838 = vmul.f32 %v768, %v621
      %v839 = vmul.f32 %v773, %v476
      %v840 = vmul.f32 %v773, %v525
      %v841 = vmul.f32 %v773, %v574
      %v842 = vmul.f32 %v773, %v623
      %v843 = vmul.f32 %v778, %v479
      %v844 = vmul.f32 %v778, %v528
      %v845 = vmul.f32 %v778, %v577
      %v846 = vmul.f32 %v778, %v626
      %v847 = vmul.f32 %v783, %v481
      %v848 = vmul.f32 %v783, %v530
      %v849 = vmul.f32 %v783, %v579
      %v850 = vmul.f32 %v783, %v628
      %v851 = vmul.f32 %v788, %v484
      %v852 = vmul.f32 %v788, %v533
      %v853 = vmul.f32 %v788, %v582
      %v854 = vmul.f32 %v788, %v631
      %v855 = vmul.f32 %v793, %v486
      %v856 = vmul.f32 %v793, %v535
      %v857 = vmul.f32 %v793, %v584
      %v858 = vmul.f32 %v793, %v633
      %v859 = vsel %vm635, %v449, %v795
      %v860 = vsel %vm636, %v498, %v796
      %v861 = vsel %vm637, %v547, %v797
      %v862 = vsel %vm638, %v596, %v798
      %v863 = vsel %vm639, %v451, %v799
      %v864 = vsel %vm640, %v500, %v800
      %v865 = vsel %vm641, %v549, %v801
      %v866 = vsel %vm642, %v598, %v802
      %v867 = vsel %vm643, %v454, %v803
      %v868 = vsel %vm644, %v503, %v804
      %v869 = vsel %vm645, %v552, %v805
      %v870 = vsel %vm646, %v601, %v806
      %v871 = vsel %vm647, %v456, %v807
      %v872 = vsel %vm648, %v505, %v808
      %v873 = vsel %vm649, %v554, %v809
      %v874 = vsel %vm650, %v603, %v810
      %v875 = vsel %vm651, %v459, %v811
      %v876 = vsel %vm652, %v508, %v812
      %v877 = vsel %vm653, %v557, %v813
      %v878 = vsel %vm654, %v606, %v814
      %v879 = vsel %vm655, %v461, %v815
      %v880 = vsel %vm656, %v510, %v816
      %v881 = vsel %vm657, %v559, %v817
      %v882 = vsel %vm658, %v608, %v818
      %v883 = vsel %vm659, %v464, %v819
      %v884 = vsel %vm660, %v513, %v820
      %v885 = vsel %vm661, %v562, %v821
      %v886 = vsel %vm662, %v611, %v822
      %v887 = vsel %vm663, %v466, %v823
      %v888 = vsel %vm664, %v515, %v824
      %v889 = vsel %vm665, %v564, %v825
      %v890 = vsel %vm666, %v613, %v826
      %v891 = vsel %vm667, %v469, %v827
      %v892 = vsel %vm668, %v518, %v828
      %v893 = vsel %vm669, %v567, %v829
      %v894 = vsel %vm670, %v616, %v830
      %v895 = vsel %vm671, %v471, %v831
      %v896 = vsel %vm672, %v520, %v832
      %v897 = vsel %vm673, %v569, %v833
      %v898 = vsel %vm674, %v618, %v834
      %v899 = vsel %vm675, %v474, %v835
      %v900 = vsel %vm676, %v523, %v836
      %v901 = vsel %vm677, %v572, %v837
      %v902 = vsel %vm678, %v621, %v838
      %v903 = vsel %vm679, %v476, %v839
      %v904 = vsel %vm680, %v525, %v840
      %v905 = vsel %vm681, %v574, %v841
      %v906 = vsel %vm682, %v623, %v842
      %v907 = vsel %vm683, %v479, %v843
      %v908 = vsel %vm684, %v528, %v844
      %v909 = vsel %vm685, %v577, %v845
      %v910 = vsel %vm686, %v626, %v846
      %v911 = vsel %vm687, %v481, %v847
      %v912 = vsel %vm688, %v530, %v848
      %v913 = vsel %vm689, %v579, %v849
      %v914 = vsel %vm690, %v628, %v850
      %v915 = vsel %vm691, %v484, %v851
      %v916 = vsel %vm692, %v533, %v852
      %v917 = vsel %vm693, %v582, %v853
      %v918 = vsel %vm694, %v631, %v854
      %v919 = vsel %vm695, %v486, %v855
      %v920 = vsel %vm696, %v535, %v856
      %v921 = vsel %vm697, %v584, %v857
      %v922 = vsel %vm698, %v633, %v858
      %923 = vst [vmem:[%s235] sm:$0xff] %v859
      %924 = vst [vmem:[%s235 + $0x8] sm:$0xff] %v860
      %925 = vst [vmem:[%s235 + $0x10] sm:$0xff] %v861
      %926 = vst [vmem:[%s235 + $0x18] sm:$0xff] %v862
      %927 = vst [vmem:[%s235 + $0x20] sm:$0xff] %v863
      %928 = vst [vmem:[%s235 + $0x28] sm:$0xff] %v864
      %929 = vst [vmem:[%s235 + $0x30] sm:$0xff] %v865
      %930 = vst [vmem:[%s235 + $0x38] sm:$0xff] %v866
      %931 = vst [vmem:[%s235 + $0x40] sm:$0xff] %v867
      %932 = vst [vmem:[%s235 + $0x48] sm:$0xff] %v868
      %933 = vst [vmem:[%s235 + $0x50] sm:$0xff] %v869
      %934 = vst [vmem:[%s235 + $0x58] sm:$0xff] %v870
      %935 = vst [vmem:[%s235 + $0x60] sm:$0xff] %v871
      %936 = vst [vmem:[%s235 + $0x68] sm:$0xff] %v872
      %937 = vst [vmem:[%s235 + $0x70] sm:$0xff] %v873
      %938 = vst [vmem:[%s235 + $0x78] sm:$0xff] %v874
      %939 = vst [vmem:[%s235 + $0x80] sm:$0xff] %v875
      %940 = vst [vmem:[%s235 + $0x88] sm:$0xff] %v876
      %941 = vst [vmem:[%s235 + $0x90] sm:$0xff] %v877
      %942 = vst [vmem:[%s235 + $0x98] sm:$0xff] %v878
      %943 = vst [vmem:[%s235 + $0xa0] sm:$0xff] %v879
      %944 = vst [vmem:[%s235 + $0xa8] sm:$0xff] %v880
      %945 = vst [vmem:[%s235 + $0xb0] sm:$0xff] %v881
      %946 = vst [vmem:[%s235 + $0xb8] sm:$0xff] %v882
      %947 = vst [vmem:[%s235 + $0xc0] sm:$0xff] %v883
      %948 = vst [vmem:[%s235 + $0xc8] sm:$0xff] %v884
      %949 = vst [vmem:[%s235 + $0xd0] sm:$0xff] %v885
      %950 = vst [vmem:[%s235 + $0xd8] sm:$0xff] %v886
      %951 = vst [vmem:[%s235 + $0xe0] sm:$0xff] %v887
      %952 = vst [vmem:[%s235 + $0xe8] sm:$0xff] %v888
      %953 = vst [vmem:[%s235 + $0xf0] sm:$0xff] %v889
      %954 = vst [vmem:[%s235 + $0xf8] sm:$0xff] %v890
      %955 = vst [vmem:[%s235 + $0x100] sm:$0xff] %v891
      %956 = vst [vmem:[%s235 + $0x108] sm:$0xff] %v892
      %957 = vst [vmem:[%s235 + $0x110] sm:$0xff] %v893
      %958 = vst [vmem:[%s235 + $0x118] sm:$0xff] %v894
      %959 = vst [vmem:[%s235 + $0x120] sm:$0xff] %v895
      %960 = vst [vmem:[%s235 + $0x128] sm:$0xff] %v896
      %961 = vst [vmem:[%s235 + $0x130] sm:$0xff] %v897
      %962 = vst [vmem:[%s235 + $0x138] sm:$0xff] %v898
      %963 = vst [vmem:[%s235 + $0x140] sm:$0xff] %v899
      %964 = vst [vmem:[%s235 + $0x148] sm:$0xff] %v900
      %965 = vst [vmem:[%s235 + $0x150] sm:$0xff] %v901
      %966 = vst [vmem:[%s235 + $0x158] sm:$0xff] %v902
      %967 = vst [vmem:[%s235 + $0x160] sm:$0xff] %v903
      %968 = vst [vmem:[%s235 + $0x168] sm:$0xff] %v904
      %969 = vst [vmem:[%s235 + $0x170] sm:$0xff] %v905
      %970 = vst [vmem:[%s235 + $0x178] sm:$0xff] %v906
      %971 = vst [vmem:[%s235 + $0x180] sm:$0xff] %v907
      %972 = vst [vmem:[%s235 + $0x188] sm:$0xff] %v908
      %973 = vst [vmem:[%s235 + $0x190] sm:$0xff] %v909
      %974 = vst [vmem:[%s235 + $0x198] sm:$0xff] %v910
      %975 = vst [vmem:[%s235 + $0x1a0] sm:$0xff] %v911
      %976 = vst [vmem:[%s235 + $0x1a8] sm:$0xff] %v912
      %977 = vst [vmem:[%s235 + $0x1b0] sm:$0xff] %v913
      %978 = vst [vmem:[%s235 + $0x1b8] sm:$0xff] %v914
      %979 = vst [vmem:[%s235 + $0x1c0] sm:$0xff] %v915
      %980 = vst [vmem:[%s235 + $0x1c8] sm:$0xff] %v916
      %981 = vst [vmem:[%s235 + $0x1d0] sm:$0xff] %v917
      %982 = vst [vmem:[%s235 + $0x1d8] sm:$0xff] %v918
      %983 = vst [vmem:[%s235 + $0x1e0] sm:$0xff] %v919
      %984 = vst [vmem:[%s235 + $0x1e8] sm:$0xff] %v920
      %985 = vst [vmem:[%s235 + $0x1f0] sm:$0xff] %v921
      %986 = vst [vmem:[%s235 + $0x1f8] sm:$0xff] %v922
      %s987 = smul.u32 4, %s20
      %p988 = scmp.lt.s32.totalorder %s19, 1
      %s989 = scalar_select %p988, %s19, 1
      %p990 = scmp.lt.s32.totalorder %s987, 3
      %s991 = scalar_select %p990, %s987, 3
      %s992 = smul.addr %s989, 64
      %s993 = sadd.s32 %s991, %s992
      %s994 = smul.addr %s993, 8
      %s995 = scalar_lea.vmem %s4, %s994
      // Predicated region
      $region37: #{conv_transpose_block.1} parent=35 // pred_check
        %p996 = pneg %p138
      $region38: #{conv_transpose_block.1} parent=35 // pred_check_branch
        %998 = sbr.rel (%p996) target = $region40
      $region39: #{conv_transpose_block.1} parent=35 // pred_region
        %s999 = smul.u32 4, %s20
      $region40: #{conv_transpose_block.1} parent=35 // pred_fallthru
        _
    $region36: #{conv_transpose_block.1} parent=5 // pred_fallthru
      _
    %p1000 = scmp.le.s32.totalorder 2, %s10
    // Predicated region
    $region41: #{conv_transpose_block.1} parent=5 // pred_check
      %p1001 = pneg %p1000
    $region42: #{conv_transpose_block.1} parent=5 // pred_check_branch
      %1003 = sbr.rel (%p1001) target = $region44
    $region43: #{conv_transpose_block.1} parent=5 // pred_region
      %s1004 = ssub.s32 %s10, 2
      // Predicated region
      $region45: #{conv_transpose_block.1} parent=43 // pred_check
        %p1005 = pneg %p144
      $region46: #{conv_transpose_block.1} parent=43 // pred_check_branch
        %1007 = sbr.rel (%p1005) target = $region48
      $region47: #{conv_transpose_block.1} parent=43 // pred_region
        %s1008 = smul.u32 4, %s22
        %p1009 = scmp.lt.s32.totalorder %s21, 1
        %s1010 = scalar_select %p1009, %s21, 1
        %p1011 = scmp.lt.s32.totalorder %s1008, 3
        %s1012 = scalar_select %p1011, %s1008, 3
        %s1013 = smul.addr %s1010, 64
        %s1014 = sadd.s32 %s1012, %s1013
        %s1015 = smul.addr %s1014, 8
        %s1016 = scalar_lea.vmem %s4, %s1015
      $region48: #{conv_transpose_block.1} parent=43 // pred_fallthru
        _
    $region44: #{conv_transpose_block.1} parent=5 // pred_fallthru
      _
  $region6: #{conv_transpose_block.1} parent=0 // loop_footer
    %s14 = sadd.s32 1, %s10
  $region7: #{conv_transpose_block.1} parent=0 // loop_footer_branch
    %9 = sbr.rel target = $region3
  $region8: #{conv_transpose_block.1} parent=0 // loop_exit
    _

</llo_original>
